<compile_context>
chip_gen: v7x
topology: tpu7x:2x2x1
jax: 0.10.0
libtpu: 0.0.40
codegen_flags: <defaults>
</compile_context>

<pallas_src>
import jax
import jax.numpy as jnp
from jax.experimental import pallas as pl
from jax.experimental.pallas import tpu as pltpu


def token_embedding_kernel(x_ref, w_ref, b_ref, o_ref):
    # x_ref: (Bt, Lp, C)   w_ref: (3, C, Td)   b_ref: (1, Td)   o_ref: (Bt, Lp, Td)
    x = x_ref[...]
    bt, lp, c = x.shape
    td = o_ref.shape[-1]

    # Circular taps along L (per-batch roll, non-negative shifts only).
    x_prev = pltpu.roll(x, shift=1, axis=1)        # x[(t-1) % Lp]
    x_next = pltpu.roll(x, shift=lp - 1, axis=1)   # x[(t+1) % Lp]

    # Lp % 8 == 0 (wrapper guarantees) -> layout-free leading-dim merge.
    rows_p = x_prev.reshape(bt * lp, c)
    rows_c = x.reshape(bt * lp, c)
    rows_n = x_next.reshape(bt * lp, c)

    # Three accumulating K=C dots; avoids the lane-offset concat + its buffer.
    acc = jnp.dot(rows_p, w_ref[0], preferred_element_type=jnp.float32)
    acc = acc + jnp.dot(rows_c, w_ref[1], preferred_element_type=jnp.float32)
    acc = acc + jnp.dot(rows_n, w_ref[2], preferred_element_type=jnp.float32)
    acc = acc + b_ref[...]                          # broadcast (1, Td)

    # Td % 128 == 0 and Lp % 8 == 0 -> layout-free reshape, lane-dense store.
    o_ref[...] = acc.reshape(bt, lp, td).astype(o_ref.dtype)


def _round_up(v, m):
    return (v + m - 1) // m * m


def _device_kind():
    try:
        return jax.devices()[0].device_kind.lower()
    except Exception:
        return ""


def _pick_d_tile(dp):
    for td in (512, 256, 128):
        if dp % td == 0:
            return td
    return dp  # unreachable: dp is a multiple of 128


def _pick_batch_tile(B, lp, c, td, in_isz, out_isz, w_isz, budget_bytes):
    """Largest Bt whose real per-step VMEM footprint fits the budget."""
    # Resident regardless of Bt: double-buffered weight block + bias block.
    fixed = 2 * 3 * c * td * w_isz + 2 * td * 4
    # Per unit of Bt: double-buffered in/out blocks, x + 2 rolled copies,
    # f32 accumulator, epilogue (bias-add result + reshape/astype copy).
    per_row = ((2 + 3) * lp * c * in_isz      # in block x2 + x/x_prev/x_next
               + 3 * lp * td * 4              # f32 acc + epilogue copies
               + 2 * lp * td * out_isz)       # out block x2
    bt = max(1, (budget_bytes - fixed) // per_row)
    return int(min(bt, B)), int(fixed), int(per_row)


def token_embedding(x, weight, bias, *, compute_dtype=None):
    """x: (B, L, c_in); weight: (d_model, c_in, 3); bias: (d_model,)."""
    B, L, C = x.shape
    D = weight.shape[0]
    out_dtype = x.dtype
    compute_dtype = compute_dtype or x.dtype
    # TODO(synk): pass compute_dtype=jnp.bfloat16 (and a bf16 out dtype) when
    # the surrounding model tolerates it - halves the dominant HBM traffic.

    kind = _device_kind()
    is_v7 = "v7" in kind
    vmem_cap = (64 << 20) if is_v7 else (128 << 20)
    budget = min(int(0.70 * vmem_cap), 56 << 20)   # v7x ~45 MiB, others <=56 MiB

    # ---- pad L to a multiple of 8 (circular-aware) ----
    xp = x.astype(compute_dtype)
    if L % 8 == 0:
        Lp = L
    else:
        Lp = _round_up(L, 8)
        if Lp - L < 2:                 # need two distinct slots for the wrap taps
            Lp += 8
        pad = jnp.zeros((B, Lp - L, C), xp.dtype)
        pad = pad.at[:, 0, :].set(xp[:, 0, :])        # x_pad[:, L]      = x[:, 0]
        pad = pad.at[:, -1, :].set(xp[:, L - 1, :])   # x_pad[:, Lp - 1] = x[:, L-1]
        xp = jnp.concatenate([xp, pad], axis=1)

    # ---- pad d_model to a multiple of 128 (lane-dense output stores) ----
    Dp = _round_up(D, 128)
    # (d_model, c_in, 3) -> (3, c_in, d_model): tap k pairs with x[(t-1+k) % L]
    # (PyTorch Conv1d cross-correlation with circular padding).
    w3 = jnp.transpose(weight, (2, 1, 0)).astype(compute_dtype)
    b2d = bias.reshape(1, D).astype(jnp.float32)
    if Dp != D:
        w3 = jnp.pad(w3, ((0, 0), (0, 0), (0, Dp - D)))
        b2d = jnp.pad(b2d, ((0, 0), (0, Dp - D)))

    Td = _pick_d_tile(Dp)

    in_isz = jnp.dtype(compute_dtype).itemsize
    out_isz = jnp.dtype(out_dtype).itemsize
    Bt, fixed, per_row = _pick_batch_tile(B, Lp, C, Td, in_isz, out_isz,
                                          in_isz, budget)

    # v7x only (2 TensorCores): guarantee >= 2 parallel grid steps.
    if is_v7 and Bt >= 2 and (Dp // Td) < 2 and (B // Bt) < 2:
        Bt = max(1, Bt // 2)

    # Pad B to a multiple of Bt instead of collapsing the tile.
    Bp = _round_up(B, Bt)
    if Bp != B:
        xp = jnp.concatenate([xp, jnp.zeros((Bp - B, Lp, C), xp.dtype)], axis=0)

    grid = (Bp // Bt, Dp // Td)

    footprint = fixed + Bt * per_row
    vmem_limit = int(min(vmem_cap - (8 << 20),
                         max(footprint + (16 << 20), 32 << 20)))

    cost = pl.CostEstimate(
        flops=2 * Bp * Lp * (3 * C) * Dp,
        transcendentals=0,
        bytes_accessed=(Bp * Lp * C * in_isz + 3 * C * Dp * in_isz
                        + Dp * 4 + Bp * Lp * Dp * out_isz),
    )

    out = pl.pallas_call(
        token_embedding_kernel,
        out_shape=jax.ShapeDtypeStruct((Bp, Lp, Dp), out_dtype),
        grid_spec=pltpu.PrefetchScalarGridSpec(
            num_scalar_prefetch=0,
            grid=grid,
            in_specs=[
                pl.BlockSpec((Bt, Lp, C), lambda i, j: (i, 0, 0)),
                pl.BlockSpec((3, C, Td), lambda i, j: (0, 0, j)),
                pl.BlockSpec((1, Td), lambda i, j: (0, j)),
            ],
            out_specs=pl.BlockSpec((Bt, Lp, Td), lambda i, j: (i, 0, j)),
        ),
        compiler_params=pltpu.CompilerParams(
            dimension_semantics=("parallel", "parallel"),
            vmem_limit_bytes=vmem_limit),
        cost_estimate=cost,
    )(xp, w3, b2d)

    return out[:B, :L, :D]


def reference(x, weight, bias):
    """Pure-JAX reference of the circular Conv1d (channels-last)."""
    x_prev = jnp.roll(x, 1, axis=1)
    x_next = jnp.roll(x, -1, axis=1)
    w = jnp.transpose(weight, (2, 1, 0))  # (3, C, D)
    y = x_prev @ w[0] + x @ w[1] + x_next @ w[2]
    return y + bias[None, None, :]


if __name__ == "__main__":
    B, L, c_in, d_model = 2, 16, 8, 32
    key = jax.random.PRNGKey(0)
    kx, kw, kb = jax.random.split(key, 3)

    x = jax.random.normal(kx, (B, L, c_in), dtype=jnp.float32)

    # Deterministic param init matching the module's __init__ scheme:
    # kaiming_normal_(fan_in, leaky_relu) for the conv weight, PyTorch-default
    # uniform for the bias.
    fan_in = c_in * 3
    gain = (2.0 / (1.0 + 0.01 ** 2)) ** 0.5
    std = gain / (fan_in ** 0.5)
    weight = std * jax.random.normal(kw, (d_model, c_in, 3), dtype=jnp.float32)
    bound = 1.0 / (fan_in ** 0.5)
    bias = jax.random.uniform(kb, (d_model,), minval=-bound, maxval=bound,
                              dtype=jnp.float32)

    out = jax.jit(token_embedding)(x, weight, bias)
    out = jax.block_until_ready(out)

    ref = reference(x, weight, bias)
    assert out.shape == (B, L, d_model)
    assert jnp.allclose(out, ref, atol=1e-5, rtol=1e-5), "mismatch vs reference"

    print("KERNEL_OK")
</pallas_src>

<mosaic_0001>
module attributes {stable_mosaic.version = 11 : i64} {
  func.func @token_embedding_kernel(%arg0: i32, %arg1: i32, %arg2: memref<2x16x8xf32, #tpu.memory_space<vmem>>, %arg3: memref<3x8x128xf32, #tpu.memory_space<vmem>>, %arg4: memref<1x128xf32, #tpu.memory_space<vmem>>, %arg5: memref<2x16x128xf32, #tpu.memory_space<vmem>>) attributes {dimension_semantics = [#tpu.dimension_semantics<parallel>, #tpu.dimension_semantics<parallel>], iteration_bounds = array<i64: 1, 1>, scalar_prefetch = 0 : i64, scratch_operands = 0 : i64, tpu.core_type = #tpu.core_type<tc>, window_params = [{transform_indices = @transform_0, window_bounds = array<i64: 2, 16, 8>}, {transform_indices = @transform_1, window_bounds = array<i64: 3, 8, 128>}, {transform_indices = @transform_2, window_bounds = array<i64: 1, 128>}, {transform_indices = @transform_3, window_bounds = array<i64: 2, 16, 128>}]} {
    %c0 = arith.constant 0 : index
    %c0_0 = arith.constant 0 : index
    %c0_1 = arith.constant 0 : index
    %0 = vector.load %arg2[%c0, %c0_0, %c0_1] : memref<2x16x8xf32, #tpu.memory_space<vmem>>, vector<2x16x8xf32>
    %c1_i32 = arith.constant 1 : i32
    %1 = tpu.dynamic_rotate %0 by %c1_i32 dim 1 : vector<2x16x8xf32>, i32 -> vector<2x16x8xf32>
    %c15_i32 = arith.constant 15 : i32
    %2 = tpu.dynamic_rotate %0 by %c15_i32 dim 1 : vector<2x16x8xf32>, i32 -> vector<2x16x8xf32>
    %3 = vector.shape_cast %1 : vector<2x16x8xf32> to vector<32x8xf32>
    %4 = vector.shape_cast %0 : vector<2x16x8xf32> to vector<32x8xf32>
    %5 = vector.shape_cast %2 : vector<2x16x8xf32> to vector<32x8xf32>
    %c0_2 = arith.constant 0 : index
    %c0_3 = arith.constant 0 : index
    %c0_4 = arith.constant 0 : index
    %6 = vector.load %arg3[%c0_2, %c0_3, %c0_4] : memref<3x8x128xf32, #tpu.memory_space<vmem>>, vector<1x8x128xf32>
    %7 = vector.shape_cast %6 : vector<1x8x128xf32> to vector<8x128xf32>
    %cst = arith.constant dense<0.000000e+00> : vector<32x128xf32>
    %8 = tpu.matmul %3, %7, %cst {dimension_numbers = #tpu.dot_dimension_numbers<[1], [0], [0], [1], [0, 0, 1, 1], [], []>} : vector<32x8xf32>, vector<8x128xf32>, vector<32x128xf32> -> vector<32x128xf32>
    %c1 = arith.constant 1 : index
    %c0_5 = arith.constant 0 : index
    %c0_6 = arith.constant 0 : index
    %9 = vector.load %arg3[%c1, %c0_5, %c0_6] : memref<3x8x128xf32, #tpu.memory_space<vmem>>, vector<1x8x128xf32>
    %10 = vector.shape_cast %9 : vector<1x8x128xf32> to vector<8x128xf32>
    %cst_7 = arith.constant dense<0.000000e+00> : vector<32x128xf32>
    %11 = tpu.matmul %4, %10, %cst_7 {dimension_numbers = #tpu.dot_dimension_numbers<[1], [0], [0], [1], [0, 0, 1, 1], [], []>} : vector<32x8xf32>, vector<8x128xf32>, vector<32x128xf32> -> vector<32x128xf32>
    %12 = arith.addf %8, %11 : vector<32x128xf32>
    %c2 = arith.constant 2 : index
    %c0_8 = arith.constant 0 : index
    %c0_9 = arith.constant 0 : index
    %13 = vector.load %arg3[%c2, %c0_8, %c0_9] : memref<3x8x128xf32, #tpu.memory_space<vmem>>, vector<1x8x128xf32>
    %14 = vector.shape_cast %13 : vector<1x8x128xf32> to vector<8x128xf32>
    %cst_10 = arith.constant dense<0.000000e+00> : vector<32x128xf32>
    %15 = tpu.matmul %5, %14, %cst_10 {dimension_numbers = #tpu.dot_dimension_numbers<[1], [0], [0], [1], [0, 0, 1, 1], [], []>} : vector<32x8xf32>, vector<8x128xf32>, vector<32x128xf32> -> vector<32x128xf32>
    %16 = arith.addf %12, %15 : vector<32x128xf32>
    %c0_11 = arith.constant 0 : index
    %c0_12 = arith.constant 0 : index
    %17 = vector.load %arg4[%c0_11, %c0_12] : memref<1x128xf32, #tpu.memory_space<vmem>>, vector<1x128xf32>
    %18 = vector.broadcast %17 : vector<1x128xf32> to vector<32x128xf32>
    %19 = arith.addf %16, %18 : vector<32x128xf32>
    %20 = vector.shape_cast %19 : vector<32x128xf32> to vector<2x16x128xf32>
    %c0_13 = arith.constant 0 : index
    %c0_14 = arith.constant 0 : index
    %c0_15 = arith.constant 0 : index
    %21 = vector.load %arg5[%c0_13, %c0_14, %c0_15] : memref<2x16x128xf32, #tpu.memory_space<vmem>>, vector<2x16x128xf32>
    tpu.vector_store %arg5[%c0_13, %c0_14, %c0_15], %20 {strides = array<i32>} : memref<2x16x128xf32, #tpu.memory_space<vmem>>, vector<2x16x128xf32>,
    return
  }
  func.func @transform_0(%arg0: i32, %arg1: i32) -> (i32, i32, i32) {
    %c0_i32 = arith.constant 0 : i32
    %c0_i32_0 = arith.constant 0 : i32
    %c0_i32_1 = arith.constant 0 : i32
    return %arg0, %c0_i32, %c0_i32_0 : i32, i32, i32
  }
  func.func @transform_1(%arg0: i32, %arg1: i32) -> (i32, i32, i32) {
    %c0_i32 = arith.constant 0 : i32
    %c0_i32_0 = arith.constant 0 : i32
    %c0_i32_1 = arith.constant 0 : i32
    return %c0_i32, %c0_i32_0, %arg1 : i32, i32, i32
  }
  func.func @transform_2(%arg0: i32, %arg1: i32) -> (i32, i32) {
    %c0_i32 = arith.constant 0 : i32
    %c0_i32_0 = arith.constant 0 : i32
    return %c0_i32, %arg1 : i32, i32
  }
  func.func @transform_3(%arg0: i32, %arg1: i32) -> (i32, i32, i32) {
    %c0_i32 = arith.constant 0 : i32
    %c0_i32_0 = arith.constant 0 : i32
    return %arg0, %c0_i32, %arg1 : i32, i32, i32
  }
}

</mosaic_0001>

<llo_original>
// kernel: token_embedding.1
$region0: #{token_embedding.1}
  #allocation0 [shape = 'u32[]', space=smem, size = 0x4, offset = 0x4, fixed_abs, tag = 'smem constant byte address 0x4 - core index']
  #allocation1 [shape = 'u32[144,128]{1,0:T(1,128)}', space=vmem, size = 0x12000, scoped, tag = 'internal scratch']
  %s0 = inlined_call_operand.vmem [shape: f32[2,16,8], index: 0, kind: input, shape index: {}]
  %s1 = inlined_call_operand.vmem [shape: f32[3,8,128], index: 1, kind: input, shape index: {}]
  %s2 = inlined_call_operand.vmem [shape: f32[1,128], index: 2, kind: input, shape index: {}]
  %s3 = inlined_call_operand.hbm [shape: f32[2,16,128], index: 3, kind: output, shape index: {}]
  %s4 = sld [smem:[#allocation0]]
  $region22: #{token_embedding.1} parent=0
    _
  %s6 = ssub.s32 1, %s4
  %s7 = scalar_select 0, %s6, %s4
  $region1: #{token_embedding.1} parent=0
    #allocation2 [shape = 'u8[16384]{0}', space=vmem, size = 0x4000, scoped, tag = 'output window, operand 0, single buffered']
    #allocation3 [shape = 's32[1]{0}', space=sflag, size = 0x4, scoped, tag = 'scoped memory for token_embedding.1']
    %8 = vsyncpa [#allocation3], 0
    // Predicated region
    $region2: #{token_embedding.1} parent=1 // pred_check
      _
    $region3: #{token_embedding.1} parent=1 // pred_check_branch
      %10 = sbr.rel (0) target = $region5
    $region4: #{token_embedding.1} parent=1 // pred_region
      _
    $region5: #{token_embedding.1} parent=1 // pred_fallthru
      _
    // Predicated region
    $region6: #{token_embedding.1} parent=1 // pred_check
      _
    $region7: #{token_embedding.1} parent=1 // pred_check_branch
      %12 = sbr.rel (0) target = $region9
    $region8: #{token_embedding.1} parent=1 // pred_region
      _
    $region9: #{token_embedding.1} parent=1 // pred_fallthru
      _
    // Predicated region
    $region10: #{token_embedding.1} parent=1 // pred_check
      _
    $region11: #{token_embedding.1} parent=1 // pred_check_branch
      %14 = sbr.rel (0) target = $region13
    $region12: #{token_embedding.1} parent=1 // pred_region
      _
    $region13: #{token_embedding.1} parent=1 // pred_fallthru
      _
    %v15 = vld [vmem:[%s0] sm:$0xff]
    %v16 = vld [vmem:[%s0 + $0x8] sm:$0xff]
    %v17 = vld [vmem:[%s0 + $0x10] sm:$0xff]
    %v18 = vld [vmem:[%s0 + $0x18] sm:$0xff]
    %v19 = vrot.slane %v15, 7
    %v20 = vrot.slane %v17, 7
    %v21 = vrot.slane %v16, 7
    %v22 = vrot.slane %v18, 7
    %v23 = vlaneseq
    %v24 = vshrl.u32 %v23, 7
    %vm25 = vcmp.lt.s32.totalorder %v24, 1
    %v26 = vsel %vm25, %v19, %v21
    %v27 = vsel %vm25, %v20, %v22
    %v28 = vsel %vm25, %v21, %v19
    %v29 = vsel %vm25, %v22, %v20
    %v30 = vrot.slane %v15, 1
    %v31 = vrot.slane %v17, 1
    %v32 = vrot.slane %v16, 1
    %v33 = vrot.slane %v18, 1
    %vm34 = vcmp.lt.s32.totalorder %v24, 7
    %v35 = vsel %vm34, %v30, %v32
    %v36 = vsel %vm34, %v31, %v33
    %v37 = vsel %vm34, %v32, %v30
    %v38 = vsel %vm34, %v33, %v31
    %v39 = vld [vmem:[%s1] sm:$0xff]
    %s40 = scalar_lea.vmem %s1, 8
    %v41 = vld [vmem:[%s40] sm:$0xff]
    %vm42 = vcmask 64512
    %v44 = vsel %vm42, %v15, 0
    %v47 = vsel %vm42, %v16, 0
    %v50 = vsel %vm42, %v17, 0
    %v53 = vsel %vm42, %v18, 0
    %55 = vmatprep.subr.mxu0 0.0
    %56 = vmatpush1.msra.mxu0 %v41
    %57 = vmatprep.subr.mxu0 0.0
    %58 = vmatpush1.msra.mxu0 0.0
    %59 = vmatprep.subr.mxu0 0.0
    %60 = vmatpush1.msra.mxu0 0.0
    %61 = vmatprep.subr.mxu0 0.0
    %62 = vmatpush1.msra.mxu0 0.0
    %63 = vmatprep.subr.mxu0 0.0
    %64 = vmatpush1.msra.mxu0 0.0
    %65 = vmatprep.subr.mxu0 0.0
    %66 = vmatpush1.msra.mxu0 0.0
    %67 = vmatprep.subr.mxu0 0.0
    %68 = vmatpush1.msra.mxu0 0.0
    %69 = vmatprep.subr.mxu0 0.0
    %70 = vmatpush1.msra.mxu0 0.0
    %71 = vmatprep.subr.mxu0 0.0
    %72 = vmatpush1.msra.mxu0 0.0
    %73 = vmatprep.subr.mxu0 0.0
    %74 = vmatpush1.msra.mxu0 0.0
    %75 = vmatprep.subr.mxu0 0.0
    %76 = vmatpush1.msra.mxu0 0.0
    %77 = vmatprep.subr.mxu0 0.0
    %78 = vmatpush1.msra.mxu0 0.0
    %79 = vmatprep.subr.mxu0 0.0
    %80 = vmatpush1.msra.mxu0 0.0
    %81 = vmatprep.subr.mxu0 0.0
    %82 = vmatpush1.msra.mxu0 0.0
    %83 = vmatprep.subr.mxu0 0.0
    %84 = vmatpush1.msra.mxu0 0.0
    %85 = vmatprep.subr.mxu0 0.0
    %86 = vmatpush1.msra.mxu0 0.0
    %87 = vmatprep.subr.mxu0 0.0
    %88 = vmatpush1.msra.mxu0 0.0
    %89 = vmatprep.subr.mxu0 0.0
    %90 = vmatpush1.msra.mxu0 0.0
    %91 = vmatprep.subr.mxu0 0.0
    %92 = vmatpush1.msra.mxu0 0.0
    %93 = vmatprep.subr.mxu0 0.0
    %94 = vmatpush1.msra.mxu0 0.0
    %95 = vmatprep.subr.mxu0 0.0
    %96 = vmatpush1.msra.mxu0 0.0
    %97 = vmatprep.subr.mxu0 0.0
    %98 = vmatpush1.msra.mxu0 0.0
    %99 = vmatprep.subr.mxu0 0.0
    %100 = vmatpush1.msra.mxu0 0.0
    %101 = vmatprep.subr.mxu0 0.0
    %102 = vmatpush1.msra.mxu0 0.0
    %103 = vmatprep.subr.mxu0 0.0
    %104 = vmatpush1.msra.mxu0 0.0
    %105 = vmatprep.subr.mxu0 0.0
    %106 = vmatpush1.msra.mxu0 0.0
    %107 = vmatprep.subr.mxu0 0.0
    %108 = vmatpush1.msra.mxu0 0.0
    %109 = vmatprep.subr.mxu0 0.0
    %110 = vmatpush1.msra.mxu0 0.0
    %111 = vmatprep.subr.mxu0 0.0
    %112 = vmatpush1.msra.mxu0 0.0
    %113 = vmatprep.subr.mxu0 0.0
    %114 = vmatpush1.msra.mxu0 0.0
    %115 = vmatprep.subr.mxu0 0.0
    %116 = vmatpush1.msra.mxu0 0.0
    %117 = vmatprep.subr.mxu0 0.0
    %118 = vmatpush1.msra.mxu0 0.0
    %119 = vmatprep.mubr.f32.mxu0 0.0
    %120 = vmatmul.mubr.f32.gmra.mrb[0].mxu0 %v44
    %v121 = vpop.f32.mrb[0].mxu0
    %v122 = vadd.f32 0.0, %v121
    %v123 = vpop.f32.mrb[0].mxu0
    %124 = vmatprep.mubr.f32.mxu0 0.0
    %125 = vmatmul.mubr.f32.gmra.mrb[0].mxu0 %v47
    %v126 = vpop.f32.mrb[0].mxu0
    %v127 = vadd.f32 0.0, %v126
    %v128 = vpop.f32.mrb[0].mxu0
    %129 = vmatprep.mubr.f32.mxu0 0.0
    %130 = vmatmul.mubr.f32.gmra.mrb[0].mxu0 %v50
    %v131 = vpop.f32.mrb[0].mxu0
    %v132 = vadd.f32 0.0, %v131
    %v133 = vpop.f32.mrb[0].mxu0
    %134 = vmatprep.mubr.f32.mxu0 0.0
    %135 = vmatmul.mubr.f32.gmra.mrb[0].mxu0 %v53
    %v136 = vpop.f32.mrb[0].mxu0
    %v137 = vadd.f32 0.0, %v136
    %v138 = vpop.f32.mrb[0].mxu0
    %139 = vdwg.mxu0
    %v141 = vsel %vm42, %v28, 0
    %v144 = vsel %vm42, %v26, 0
    %v147 = vsel %vm42, %v29, 0
    %v150 = vsel %vm42, %v27, 0
    %152 = vmatprep.subr.mxu0 0.0
    %153 = vmatpush1.msra.mxu0 %v39
    %154 = vmatprep.subr.mxu0 0.0
    %155 = vmatpush1.msra.mxu0 0.0
    %156 = vmatprep.subr.mxu0 0.0
    %157 = vmatpush1.msra.mxu0 0.0
    %158 = vmatprep.subr.mxu0 0.0
    %159 = vmatpush1.msra.mxu0 0.0
    %160 = vmatprep.subr.mxu0 0.0
    %161 = vmatpush1.msra.mxu0 0.0
    %162 = vmatprep.subr.mxu0 0.0
    %163 = vmatpush1.msra.mxu0 0.0
    %164 = vmatprep.subr.mxu0 0.0
    %165 = vmatpush1.msra.mxu0 0.0
    %166 = vmatprep.subr.mxu0 0.0
    %167 = vmatpush1.msra.mxu0 0.0
    %168 = vmatprep.subr.mxu0 0.0
    %169 = vmatpush1.msra.mxu0 0.0
    %170 = vmatprep.subr.mxu0 0.0
    %171 = vmatpush1.msra.mxu0 0.0
    %172 = vmatprep.subr.mxu0 0.0
    %173 = vmatpush1.msra.mxu0 0.0
    %174 = vmatprep.subr.mxu0 0.0
    %175 = vmatpush1.msra.mxu0 0.0
    %176 = vmatprep.subr.mxu0 0.0
    %177 = vmatpush1.msra.mxu0 0.0
    %178 = vmatprep.subr.mxu0 0.0
    %179 = vmatpush1.msra.mxu0 0.0
    %180 = vmatprep.subr.mxu0 0.0
    %181 = vmatpush1.msra.mxu0 0.0
    %182 = vmatprep.subr.mxu0 0.0
    %183 = vmatpush1.msra.mxu0 0.0
    %184 = vmatprep.subr.mxu0 0.0
    %185 = vmatpush1.msra.mxu0 0.0
    %186 = vmatprep.subr.mxu0 0.0
    %187 = vmatpush1.msra.mxu0 0.0
    %188 = vmatprep.subr.mxu0 0.0
    %189 = vmatpush1.msra.mxu0 0.0
    %190 = vmatprep.subr.mxu0 0.0
    %191 = vmatpush1.msra.mxu0 0.0
    %192 = vmatprep.subr.mxu0 0.0
    %193 = vmatpush1.msra.mxu0 0.0
    %194 = vmatprep.subr.mxu0 0.0
    %195 = vmatpush1.msra.mxu0 0.0
    %196 = vmatprep.subr.mxu0 0.0
    %197 = vmatpush1.msra.mxu0 0.0
    %198 = vmatprep.subr.mxu0 0.0
    %199 = vmatpush1.msra.mxu0 0.0
    %200 = vmatprep.subr.mxu0 0.0
    %201 = vmatpush1.msra.mxu0 0.0
    %202 = vmatprep.subr.mxu0 0.0
    %203 = vmatpush1.msra.mxu0 0.0
    %204 = vmatprep.subr.mxu0 0.0
    %205 = vmatpush1.msra.mxu0 0.0
    %206 = vmatprep.subr.mxu0 0.0
    %207 = vmatpush1.msra.mxu0 0.0
    %208 = vmatprep.subr.mxu0 0.0
    %209 = vmatpush1.msra.mxu0 0.0
    %210 = vmatprep.subr.mxu0 0.0
    %211 = vmatpush1.msra.mxu0 0.0
    %212 = vmatprep.subr.mxu0 0.0
    %213 = vmatpush1.msra.mxu0 0.0
    %214 = vmatprep.subr.mxu0 0.0
    %215 = vmatpush1.msra.mxu0 0.0
    %216 = vmatprep.mubr.f32.mxu0 0.0
    %217 = vmatmul.mubr.f32.gmra.mrb[0].mxu0 %v141
    %v218 = vpop.f32.mrb[0].mxu0
    %v219 = vadd.f32 %v122, %v218
    %v220 = vpop.f32.mrb[0].mxu0
    %221 = vmatprep.mubr.f32.mxu0 0.0
    %222 = vmatmul.mubr.f32.gmra.mrb[0].mxu0 %v144
    %v223 = vpop.f32.mrb[0].mxu0
    %v224 = vadd.f32 %v127, %v223
    %v225 = vpop.f32.mrb[0].mxu0
    %226 = vmatprep.mubr.f32.mxu0 0.0
    %227 = vmatmul.mubr.f32.gmra.mrb[0].mxu0 %v147
    %v228 = vpop.f32.mrb[0].mxu0
    %v229 = vadd.f32 %v132, %v228
    %v230 = vpop.f32.mrb[0].mxu0
    %231 = vmatprep.mubr.f32.mxu0 0.0
    %232 = vmatmul.mubr.f32.gmra.mrb[0].mxu0 %v150
    %v233 = vpop.f32.mrb[0].mxu0
    %v234 = vadd.f32 %v137, %v233
    %v235 = vpop.f32.mrb[0].mxu0
    %236 = vdwg.mxu0
    %s237 = scalar_lea.vmem %s1, 16
    %v238 = vld [vmem:[%s237] sm:$0xff]
    %v240 = vsel %vm42, %v35, 0
    %v243 = vsel %vm42, %v37, 0
    %v246 = vsel %vm42, %v36, 0
    %v249 = vsel %vm42, %v38, 0
    %251 = vmatprep.subr.mxu0 0.0
    %252 = vmatpush1.msra.mxu0 %v238
    %253 = vmatprep.subr.mxu0 0.0
    %254 = vmatpush1.msra.mxu0 0.0
    %255 = vmatprep.subr.mxu0 0.0
    %256 = vmatpush1.msra.mxu0 0.0
    %257 = vmatprep.subr.mxu0 0.0
    %258 = vmatpush1.msra.mxu0 0.0
    %259 = vmatprep.subr.mxu0 0.0
    %260 = vmatpush1.msra.mxu0 0.0
    %261 = vmatprep.subr.mxu0 0.0
    %262 = vmatpush1.msra.mxu0 0.0
    %263 = vmatprep.subr.mxu0 0.0
    %264 = vmatpush1.msra.mxu0 0.0
    %265 = vmatprep.subr.mxu0 0.0
    %266 = vmatpush1.msra.mxu0 0.0
    %267 = vmatprep.subr.mxu0 0.0
    %268 = vmatpush1.msra.mxu0 0.0
    %269 = vmatprep.subr.mxu0 0.0
    %270 = vmatpush1.msra.mxu0 0.0
    %271 = vmatprep.subr.mxu0 0.0
    %272 = vmatpush1.msra.mxu0 0.0
    %273 = vmatprep.subr.mxu0 0.0
    %274 = vmatpush1.msra.mxu0 0.0
    %275 = vmatprep.subr.mxu0 0.0
    %276 = vmatpush1.msra.mxu0 0.0
    %277 = vmatprep.subr.mxu0 0.0
    %278 = vmatpush1.msra.mxu0 0.0
    %279 = vmatprep.subr.mxu0 0.0
    %280 = vmatpush1.msra.mxu0 0.0
    %281 = vmatprep.subr.mxu0 0.0
    %282 = vmatpush1.msra.mxu0 0.0
    %283 = vmatprep.subr.mxu0 0.0
    %284 = vmatpush1.msra.mxu0 0.0
    %285 = vmatprep.subr.mxu0 0.0
    %286 = vmatpush1.msra.mxu0 0.0
    %287 = vmatprep.subr.mxu0 0.0
    %288 = vmatpush1.msra.mxu0 0.0
    %289 = vmatprep.subr.mxu0 0.0
    %290 = vmatpush1.msra.mxu0 0.0
    %291 = vmatprep.subr.mxu0 0.0
    %292 = vmatpush1.msra.mxu0 0.0
    %293 = vmatprep.subr.mxu0 0.0
    %294 = vmatpush1.msra.mxu0 0.0
    %295 = vmatprep.subr.mxu0 0.0
    %296 = vmatpush1.msra.mxu0 0.0
    %297 = vmatprep.subr.mxu0 0.0
    %298 = vmatpush1.msra.mxu0 0.0
    %299 = vmatprep.subr.mxu0 0.0
    %300 = vmatpush1.msra.mxu0 0.0
    %301 = vmatprep.subr.mxu0 0.0
    %302 = vmatpush1.msra.mxu0 0.0
    %303 = vmatprep.subr.mxu0 0.0
    %304 = vmatpush1.msra.mxu0 0.0
    %305 = vmatprep.subr.mxu0 0.0
    %306 = vmatpush1.msra.mxu0 0.0
    %307 = vmatprep.subr.mxu0 0.0
    %308 = vmatpush1.msra.mxu0 0.0
    %309 = vmatprep.subr.mxu0 0.0
    %310 = vmatpush1.msra.mxu0 0.0
    %311 = vmatprep.subr.mxu0 0.0
    %312 = vmatpush1.msra.mxu0 0.0
    %313 = vmatprep.subr.mxu0 0.0
    %314 = vmatpush1.msra.mxu0 0.0
    %315 = vmatprep.mubr.f32.mxu0 0.0
    %316 = vmatmul.mubr.f32.gmra.mrb[0].mxu0 %v240
    %v317 = vpop.f32.mrb[0].mxu0
    %v318 = vadd.f32 0.0, %v317
    %v319 = vpop.f32.mrb[0].mxu0
    %320 = vmatprep.mubr.f32.mxu0 0.0
    %321 = vmatmul.mubr.f32.gmra.mrb[0].mxu0 %v243
    %v322 = vpop.f32.mrb[0].mxu0
    %v323 = vadd.f32 0.0, %v322
    %v324 = vpop.f32.mrb[0].mxu0
    %325 = vmatprep.mubr.f32.mxu0 0.0
    %326 = vmatmul.mubr.f32.gmra.mrb[0].mxu0 %v246
    %v327 = vpop.f32.mrb[0].mxu0
    %v328 = vadd.f32 0.0, %v327
    %v329 = vpop.f32.mrb[0].mxu0
    %330 = vmatprep.mubr.f32.mxu0 0.0
    %331 = vmatmul.mubr.f32.gmra.mrb[0].mxu0 %v249
    %v332 = vpop.f32.mrb[0].mxu0
    %v333 = vadd.f32 0.0, %v332
    %v334 = vpop.f32.mrb[0].mxu0
    %335 = vdwg.mxu0
    %v336 = vadd.f32 %v219, %v318
    %v337 = vadd.f32 %v224, %v323
    %v338 = vadd.f32 %v229, %v328
    %v339 = vadd.f32 %v234, %v333
    %v340 = vld [vmem:[%s2] sm:$0x1]
    %v342 = vlaneseq
    %v343 = vshrl.u32 %v342, 7
    %v344 = vsub.s32 0, %v343
    %v345 = vrot.slane %v340, %v344
    %v347 = vadd.f32 %v336, %v345
    %v348 = vadd.f32 %v337, %v345
    %v349 = vadd.f32 %v338, %v345
    %v350 = vadd.f32 %v339, %v345
    %351 = vst [vmem:[#allocation2] sm:$0xff] %v347
    %352 = vst [vmem:[#allocation2 + $0x8] sm:$0xff] %v348
    %353 = vst [vmem:[#allocation2 + $0x10] sm:$0xff] %v349
    %354 = vst [vmem:[#allocation2 + $0x18] sm:$0xff] %v350
    // Predicated region
    $region14: #{token_embedding.1} parent=1 // pred_check
      _
    $region15: #{token_embedding.1} parent=1 // pred_check_branch
      %356 = sbr.rel (0) target = $region17
    $region16: #{token_embedding.1} parent=1 // pred_region
      %s358 = ssub.s32 512, 512
      %359 = vsyncadd [#allocation3], %s358
      %s360 = sshll.u32 [#allocation2], 4
      %s361 = int_to_ptr.vmem [resolvable:$true] %s360
      %366 = dma.vmem_to_hbm [thread:$0]  %s361, 512, %s3, [#allocation3], 128, 128, 8
    $region17: #{token_embedding.1} parent=1 // pred_fallthru
      _
    // Predicated region
    $region18: #{token_embedding.1} parent=1 // pred_check
      _
    $region19: #{token_embedding.1} parent=1 // pred_check_branch
      %368 = sbr.rel (0) target = $region21
    $region20: #{token_embedding.1} parent=1 // pred_region
      %369 = dma.done [#allocation3], 512
    $region21: #{token_embedding.1} parent=1 // pred_fallthru
      _
    %370 = vsyncpa [#allocation3], 1

</llo_original>
